<compile_context>
chip_gen: v7x
topology: tpu7x:2x2x1
jax: 0.10.0
libtpu: 0.0.40
codegen_flags: <defaults>
</compile_context>

<pallas_src>
import jax
import jax.numpy as jnp
from jax.experimental import pallas as pl
from jax.experimental.pallas import tpu as pltpu


def _hidden_kernel(ctx_ref, dec_ref, w1a_ref, w1b_ref, b1_ref, h_ref):
    """h = ctx @ W1a + dec @ W1b + b1  (first Linear; concat fused via split W1)."""
    acc = jnp.dot(ctx_ref[...], w1a_ref[...], preferred_element_type=jnp.float32)
    acc = acc + jnp.dot(dec_ref[...], w1b_ref[...], preferred_element_type=jnp.float32)
    acc = acc + b1_ref[...]
    # TODO(synk): nn.Dropout(p=0.5) train-mode masking (pltpu.prng_seed /
    # prng_random_bits + 1/(1-p) scale) not implemented; eval-mode identity here.
    h_ref[...] = acc.astype(h_ref.dtype)


def _vocab_kernel(h_ref, w2_ref, b2_ref, out_ref):
    """energy tile = h @ W2_tile + b2_tile  (second Linear, vocab-tiled)."""
    e = jnp.dot(h_ref[...], w2_ref[...], preferred_element_type=jnp.float32)
    out_ref[...] = (e + b2_ref[...]).astype(out_ref.dtype)


def pg_readout(context, decoder_state, W1, b1, W2, b2, *, tile_v=2048, tile_b=256):
    """context: (B, enc_hidden), decoder_state: (B, dec_hidden).

    W1: (dec_hidden, enc_hidden + dec_hidden)   (PyTorch nn.Linear layout)
    b1: (dec_hidden,)
    W2: (vocab, dec_hidden)
    b2: (vocab,)
    Returns energy: (B, vocab) float32.
    """
    B, enc_dim = context.shape
    dec_dim = decoder_state.shape[1]
    hidden = W1.shape[0]
    vocab = W2.shape[0]

    # bf16 for the HBM-bound streams; f32 accumulation on the MXU.
    ctx = context.astype(jnp.bfloat16)
    dst = decoder_state.astype(jnp.bfloat16)
    w1a = W1[:, :enc_dim].T.astype(jnp.bfloat16)      # (enc_dim, hidden)
    w1b = W1[:, enc_dim:].T.astype(jnp.bfloat16)      # (dec_dim, hidden)
    b1_r = b1.reshape(1, hidden).astype(jnp.float32)
    w2_t = W2.T.astype(jnp.bfloat16)                  # (hidden, vocab)
    b2_r = b2.reshape(1, vocab).astype(jnp.float32)

    # --- tile sizes / padding ------------------------------------------------
    tb = B if B <= tile_b else tile_b
    Bp = pl.cdiv(B, tb) * tb
    if Bp != B:
        pad_b = Bp - B
        ctx = jnp.pad(ctx, ((0, pad_b), (0, 0)))
        dst = jnp.pad(dst, ((0, pad_b), (0, 0)))

    tv = min(tile_v, pl.cdiv(vocab, 128) * 128)       # lane-dense, collapses for small vocab
    Vp = pl.cdiv(vocab, tv) * tv
    if Vp != vocab:
        w2_t = jnp.pad(w2_t, ((0, 0), (0, Vp - vocab)))
        b2_r = jnp.pad(b2_r, ((0, 0), (0, Vp - vocab)))

    nb = Bp // tb
    nv = Vp // tv

    # --- kernel 1: hidden projection (tiny; both grid axes independent) ------
    h = pl.pallas_call(
        _hidden_kernel,
        out_shape=jax.ShapeDtypeStruct((Bp, hidden), jnp.bfloat16),
        grid_spec=pltpu.PrefetchScalarGridSpec(
            num_scalar_prefetch=0,
            grid=(nb,),
            in_specs=[
                pl.BlockSpec((tb, enc_dim), lambda i: (i, 0)),       # context rows
                pl.BlockSpec((tb, dec_dim), lambda i: (i, 0)),       # decoder rows
                pl.BlockSpec((enc_dim, hidden), lambda i: (0, 0)),   # W1a^T (full)
                pl.BlockSpec((dec_dim, hidden), lambda i: (0, 0)),   # W1b^T (full)
                pl.BlockSpec((1, hidden), lambda i: (0, 0)),         # b1
            ],
            out_specs=pl.BlockSpec((tb, hidden), lambda i: (i, 0)),
        ),
        compiler_params=pltpu.CompilerParams(
            dimension_semantics=("parallel",)),
    )(ctx, dst, w1a, w1b, b1_r)

    # --- kernel 2: vocab GEMM, fully parallel grid ----------------------------
    vmem_est = (
        2 * hidden * tv * 2      # double-buffered W2 tile (bf16)
        + 2 * tb * tv * 4        # double-buffered output tile (f32)
        + 2 * tb * hidden * 2    # double-buffered h tile (bf16)
        + 2 * tv * 4             # b2 tile
    )
    vmem_limit = int(min(max(32 << 20, 2 * vmem_est), 100 << 20))

    energy = pl.pallas_call(
        _vocab_kernel,
        out_shape=jax.ShapeDtypeStruct((Bp, Vp), jnp.float32),
        grid_spec=pltpu.PrefetchScalarGridSpec(
            num_scalar_prefetch=0,
            grid=(nb, nv),
            in_specs=[
                pl.BlockSpec((tb, hidden), lambda i, j: (i, 0)),     # h (batch tile)
                pl.BlockSpec((hidden, tv), lambda i, j: (0, j)),     # W2^T vocab tile
                pl.BlockSpec((1, tv), lambda i, j: (0, j)),          # b2 vocab tile
            ],
            out_specs=pl.BlockSpec((tb, tv), lambda i, j: (i, j)),
        ),
        compiler_params=pltpu.CompilerParams(
            dimension_semantics=("parallel", "parallel"),
            vmem_limit_bytes=vmem_limit),
    )(h, w2_t, b2_r)

    return energy[:B, :vocab]


if __name__ == "__main__":
    # Small, module-consistent shapes.
    B = 8
    enc_hidden = 32
    dec_hidden = 32
    vocab = 512
    in_dim = enc_hidden + dec_hidden

    key = jax.random.PRNGKey(0)
    k_ctx, k_dec, k_w1, k_b1, k_w2, k_b2 = jax.random.split(key, 6)

    context = jax.random.normal(k_ctx, (B, enc_hidden), dtype=jnp.float32)
    decoder_state = jax.random.normal(k_dec, (B, dec_hidden), dtype=jnp.float32)

    # Parameter shapes follow nn.Linear: (out, in).
    W1 = jax.random.normal(k_w1, (dec_hidden, in_dim), dtype=jnp.float32) * 0.05
    b1 = jax.random.normal(k_b1, (dec_hidden,), dtype=jnp.float32) * 0.05
    W2 = jax.random.normal(k_w2, (vocab, dec_hidden), dtype=jnp.float32) * 0.05
    b2 = jax.random.normal(k_b2, (vocab,), dtype=jnp.float32) * 0.05

    energy = pg_readout(context, decoder_state, W1, b1, W2, b2)
    energy = jax.block_until_ready(energy)

    # Pure-JAX f32 reference (eval-mode dropout = identity).
    x = jnp.concatenate([context, decoder_state], axis=1)
    h_ref = x @ W1.T + b1
    e_ref = h_ref @ W2.T + b2

    assert energy.shape == (B, vocab)
    # bf16 weights/activations in the kernel -> looser tolerance vs f32 reference.
    assert jnp.allclose(energy, e_ref, atol=3e-2, rtol=3e-2), float(
        jnp.max(jnp.abs(energy - e_ref)))

    print("KERNEL_OK")
</pallas_src>

<mosaic_0001>
module attributes {stable_mosaic.version = 11 : i64} {
  func.func @_hidden_kernel(%arg0: i32, %arg1: memref<8x32xbf16, #tpu.memory_space<vmem>>, %arg2: memref<8x32xbf16, #tpu.memory_space<vmem>>, %arg3: memref<32x32xbf16, #tpu.memory_space<vmem>>, %arg4: memref<32x32xbf16, #tpu.memory_space<vmem>>, %arg5: memref<1x32xf32, #tpu.memory_space<vmem>>, %arg6: memref<8x32xbf16, #tpu.memory_space<vmem>>) attributes {dimension_semantics = [#tpu.dimension_semantics<parallel>], iteration_bounds = array<i64: 1>, scalar_prefetch = 0 : i64, scratch_operands = 0 : i64, tpu.core_type = #tpu.core_type<tc>, window_params = [{transform_indices = @transform_0, window_bounds = array<i64: 8, 32>}, {transform_indices = @transform_1, window_bounds = array<i64: 8, 32>}, {pipeline_mode = #tpu.pipeline_mode<synchronous>, transform_indices = @transform_2, window_bounds = array<i64: 32, 32>}, {pipeline_mode = #tpu.pipeline_mode<synchronous>, transform_indices = @transform_3, window_bounds = array<i64: 32, 32>}, {pipeline_mode = #tpu.pipeline_mode<synchronous>, transform_indices = @transform_4, window_bounds = array<i64: 1, 32>}, {transform_indices = @transform_5, window_bounds = array<i64: 8, 32>}]} {
    %c0 = arith.constant 0 : index
    %c0_0 = arith.constant 0 : index
    %0 = vector.load %arg1[%c0, %c0_0] : memref<8x32xbf16, #tpu.memory_space<vmem>>, vector<8x32xbf16>
    %c0_1 = arith.constant 0 : index
    %c0_2 = arith.constant 0 : index
    %1 = vector.load %arg3[%c0_1, %c0_2] : memref<32x32xbf16, #tpu.memory_space<vmem>>, vector<32x32xbf16>
    %cst = arith.constant dense<0.000000e+00> : vector<8x32xf32>
    %2 = tpu.matmul %0, %1, %cst {dimension_numbers = #tpu.dot_dimension_numbers<[1], [0], [0], [1], [0, 0, 1, 1], [], []>} : vector<8x32xbf16>, vector<32x32xbf16>, vector<8x32xf32> -> vector<8x32xf32>
    %c0_3 = arith.constant 0 : index
    %c0_4 = arith.constant 0 : index
    %3 = vector.load %arg2[%c0_3, %c0_4] : memref<8x32xbf16, #tpu.memory_space<vmem>>, vector<8x32xbf16>
    %c0_5 = arith.constant 0 : index
    %c0_6 = arith.constant 0 : index
    %4 = vector.load %arg4[%c0_5, %c0_6] : memref<32x32xbf16, #tpu.memory_space<vmem>>, vector<32x32xbf16>
    %cst_7 = arith.constant dense<0.000000e+00> : vector<8x32xf32>
    %5 = tpu.matmul %3, %4, %cst_7 {dimension_numbers = #tpu.dot_dimension_numbers<[1], [0], [0], [1], [0, 0, 1, 1], [], []>} : vector<8x32xbf16>, vector<32x32xbf16>, vector<8x32xf32> -> vector<8x32xf32>
    %6 = arith.addf %2, %5 : vector<8x32xf32>
    %c0_8 = arith.constant 0 : index
    %c0_9 = arith.constant 0 : index
    %7 = vector.load %arg5[%c0_8, %c0_9] : memref<1x32xf32, #tpu.memory_space<vmem>>, vector<1x32xf32>
    %8 = vector.broadcast %7 : vector<1x32xf32> to vector<8x32xf32>
    %9 = arith.addf %6, %8 : vector<8x32xf32>
    %10 = arith.truncf %9 : vector<8x32xf32> to vector<8x32xbf16>
    %c0_10 = arith.constant 0 : index
    %c0_11 = arith.constant 0 : index
    %11 = vector.load %arg6[%c0_10, %c0_11] : memref<8x32xbf16, #tpu.memory_space<vmem>>, vector<8x32xbf16>
    tpu.vector_store %arg6[%c0_10, %c0_11], %10 {strides = array<i32>} : memref<8x32xbf16, #tpu.memory_space<vmem>>, vector<8x32xbf16>,
    return
  }
  func.func @transform_0(%arg0: i32) -> (i32, i32) {
    %c0_i32 = arith.constant 0 : i32
    %c0_i32_0 = arith.constant 0 : i32
    return %arg0, %c0_i32 : i32, i32
  }
  func.func @transform_1(%arg0: i32) -> (i32, i32) {
    %c0_i32 = arith.constant 0 : i32
    %c0_i32_0 = arith.constant 0 : i32
    return %arg0, %c0_i32 : i32, i32
  }
  func.func @transform_2(%arg0: i32) -> (i32, i32) {
    %c0_i32 = arith.constant 0 : i32
    %c0_i32_0 = arith.constant 0 : i32
    %c0_i32_1 = arith.constant 0 : i32
    return %c0_i32, %c0_i32_0 : i32, i32
  }
  func.func @transform_3(%arg0: i32) -> (i32, i32) {
    %c0_i32 = arith.constant 0 : i32
    %c0_i32_0 = arith.constant 0 : i32
    %c0_i32_1 = arith.constant 0 : i32
    return %c0_i32, %c0_i32_0 : i32, i32
  }
  func.func @transform_4(%arg0: i32) -> (i32, i32) {
    %c0_i32 = arith.constant 0 : i32
    %c0_i32_0 = arith.constant 0 : i32
    %c0_i32_1 = arith.constant 0 : i32
    return %c0_i32, %c0_i32_0 : i32, i32
  }
  func.func @transform_5(%arg0: i32) -> (i32, i32) {
    %c0_i32 = arith.constant 0 : i32
    %c0_i32_0 = arith.constant 0 : i32
    return %arg0, %c0_i32 : i32, i32
  }
}

</mosaic_0001>

<llo_original>
// kernel: tpu_custom_call.1
$region0: #{tpu_custom_call.1}
  #allocation0 [shape = 'u32[]', space=smem, size = 0x4, offset = 0x4, fixed_abs, tag = 'smem constant byte address 0x4 - core index']
  #allocation1 [shape = 'u32[144,128]{1,0:T(1,128)}', space=vmem, size = 0x12000, scoped, tag = 'internal scratch']
  %s0 = inlined_call_operand.hbm [shape: bf16[8,32], index: 0, kind: input, shape index: {}]
  %s1 = inlined_call_operand.hbm [shape: bf16[8,32], index: 1, kind: input, shape index: {}]
  %s2 = inlined_call_operand.hbm [shape: bf16[32,32], index: 2, kind: input, shape index: {}]
  %s3 = inlined_call_operand.hbm [shape: bf16[32,32], index: 3, kind: input, shape index: {}]
  %s4 = inlined_call_operand.vmem [shape: f32[1,32], index: 4, kind: input, shape index: {}]
  %s5 = inlined_call_operand.hbm [shape: bf16[8,32], index: 5, kind: output, shape index: {}]
  %s6 = sld [smem:[#allocation0]]
  $region46: #{tpu_custom_call.1} parent=0
    _
  %s8 = ssub.s32 1, %s6
  %s9 = scalar_select 0, %s8, %s6
  $region1: #{tpu_custom_call.1} parent=0
    #allocation2 [shape = 'u8[2048]{0}', space=vmem, size = 0x800, scoped, tag = 'input window, operand 0, single buffered']
    #allocation3 [shape = 's32[1]{0}', space=sflag, size = 0x4, scoped, tag = 'scoped memory for tpu_custom_call.1']
    #allocation4 [shape = 's32[1]{0}', space=sflag, size = 0x4, scoped, tag = 'scoped memory for tpu_custom_call.1']
    #allocation5 [shape = 'u8[2048]{0}', space=vmem, size = 0x800, scoped, tag = 'input window, operand 1, single buffered']
    #allocation6 [shape = 's32[1]{0}', space=sflag, size = 0x4, scoped, tag = 'scoped memory for tpu_custom_call.1']
    #allocation7 [shape = 'u8[8192]{0}', space=vmem, size = 0x2000, scoped, tag = 'input window, operand 2, single buffered']
    #allocation8 [shape = 'u8[8192]{0}', space=vmem, size = 0x2000, scoped, tag = 'input window, operand 3, single buffered']
    #allocation9 [shape = 's32[1]{0}', space=sflag, size = 0x4, scoped, tag = 'scoped memory for tpu_custom_call.1']
    #allocation10 [shape = 'u8[2048]{0}', space=vmem, size = 0x800, scoped, tag = 'output window, operand 0, single buffered']
    %10 = vsyncpa [#allocation3], 0
    %11 = vsyncpa [#allocation6], 0
    %12 = vsyncpa [#allocation9], 0
    %13 = vsyncpa [#allocation4], 0
    // Predicated region
    $region2: #{tpu_custom_call.1} parent=1 // pred_check
      _
    $region3: #{tpu_custom_call.1} parent=1 // pred_check_branch
      %15 = sbr.rel (0) target = $region5
    $region4: #{tpu_custom_call.1} parent=1 // pred_region
      %s17 = ssub.s32 64, 64
      %18 = vsyncadd [#allocation3], %s17
      %s20 = sshll.u32 [#allocation2], 4
      %s21 = int_to_ptr.vmem [resolvable:$true] %s20
      %23 = dma.hbm_to_vmem [thread:$0]  %s0, 64, %s21, [#allocation3]
    $region5: #{tpu_custom_call.1} parent=1 // pred_fallthru
      _
    // Predicated region
    $region6: #{tpu_custom_call.1} parent=1 // pred_check
      _
    $region7: #{tpu_custom_call.1} parent=1 // pred_check_branch
      %25 = sbr.rel (0) target = $region9
    $region8: #{tpu_custom_call.1} parent=1 // pred_region
      %s27 = ssub.s32 64, 64
      %28 = vsyncadd [#allocation6], %s27
      %s30 = sshll.u32 [#allocation5], 4
      %s31 = int_to_ptr.vmem [resolvable:$true] %s30
      %33 = dma.hbm_to_vmem [thread:$0]  %s1, 64, %s31, [#allocation6]
    $region9: #{tpu_custom_call.1} parent=1 // pred_fallthru
      _
    // Predicated region
    $region10: #{tpu_custom_call.1} parent=1 // pred_check
      _
    $region11: #{tpu_custom_call.1} parent=1 // pred_check_branch
      %35 = sbr.rel (0) target = $region13
    $region12: #{tpu_custom_call.1} parent=1 // pred_region
      %s37 = ssub.s32 256, 256
      %38 = vsyncadd [#allocation6], %s37
      %s39 = sshll.u32 [#allocation7], 4
      %s40 = int_to_ptr.vmem [resolvable:$true] %s39
      %45 = dma.hbm_to_vmem [thread:$0]  %s2, 256, %s40, [#allocation6], 64, 64, 4
    $region13: #{tpu_custom_call.1} parent=1 // pred_fallthru
      _
    // Predicated region
    $region14: #{tpu_custom_call.1} parent=1 // pred_check
      _
    $region15: #{tpu_custom_call.1} parent=1 // pred_check_branch
      %47 = sbr.rel (0) target = $region17
    $region16: #{tpu_custom_call.1} parent=1 // pred_region
      %s49 = ssub.s32 256, 256
      %50 = vsyncadd [#allocation9], %s49
      %s51 = sshll.u32 [#allocation8], 4
      %s52 = int_to_ptr.vmem [resolvable:$true] %s51
      %57 = dma.hbm_to_vmem [thread:$0]  %s3, 256, %s52, [#allocation9], 64, 64, 4
    $region17: #{tpu_custom_call.1} parent=1 // pred_fallthru
      _
    // Predicated region
    $region18: #{tpu_custom_call.1} parent=1 // pred_check
      _
    $region19: #{tpu_custom_call.1} parent=1 // pred_check_branch
      %59 = sbr.rel (0) target = $region21
    $region20: #{tpu_custom_call.1} parent=1 // pred_region
      _
    $region21: #{tpu_custom_call.1} parent=1 // pred_fallthru
      _
    // Predicated region
    $region22: #{tpu_custom_call.1} parent=1 // pred_check
      _
    $region23: #{tpu_custom_call.1} parent=1 // pred_check_branch
      %61 = sbr.rel (0) target = $region25
    $region24: #{tpu_custom_call.1} parent=1 // pred_region
      %62 = dma.done [#allocation3], 64
    $region25: #{tpu_custom_call.1} parent=1 // pred_fallthru
      _
    // Predicated region
    $region26: #{tpu_custom_call.1} parent=1 // pred_check
      _
    $region27: #{tpu_custom_call.1} parent=1 // pred_check_branch
      %64 = sbr.rel (0) target = $region29
    $region28: #{tpu_custom_call.1} parent=1 // pred_region
      %65 = dma.done [#allocation6], 64
    $region29: #{tpu_custom_call.1} parent=1 // pred_fallthru
      _
    // Predicated region
    $region30: #{tpu_custom_call.1} parent=1 // pred_check
      _
    $region31: #{tpu_custom_call.1} parent=1 // pred_check_branch
      %67 = sbr.rel (0) target = $region33
    $region32: #{tpu_custom_call.1} parent=1 // pred_region
      %68 = dma.done [#allocation6], 256
    $region33: #{tpu_custom_call.1} parent=1 // pred_fallthru
      _
    // Predicated region
    $region34: #{tpu_custom_call.1} parent=1 // pred_check
      _
    $region35: #{tpu_custom_call.1} parent=1 // pred_check_branch
      %70 = sbr.rel (0) target = $region37
    $region36: #{tpu_custom_call.1} parent=1 // pred_region
      %71 = dma.done [#allocation9], 256
    $region37: #{tpu_custom_call.1} parent=1 // pred_fallthru
      _
    %v73 = vld [vmem:[#allocation2] sm:$0xf]
    %v74 = vld [vmem:[#allocation7] sm:$0xf]
    %v75 = vld [vmem:[#allocation7 + $0x4] sm:$0xf]
    %v76 = vld [vmem:[#allocation7 + $0x8] sm:$0xf]
    %v77 = vld [vmem:[#allocation7 + $0xc] sm:$0xf]
    %v78 = vld [vmem:[#allocation5] sm:$0xf]
    %v79 = vld [vmem:[#allocation8] sm:$0xf]
    %v80 = vld [vmem:[#allocation8 + $0x4] sm:$0xf]
    %v81 = vld [vmem:[#allocation8 + $0x8] sm:$0xf]
    %v82 = vld [vmem:[#allocation8 + $0xc] sm:$0xf]
    %v87 = vunpack.c.l.b16 %v79
    %v88 = vunpack.c.l.b16 %v80
    %v89 = vunpack.c.l.b16 %v81
    %v90 = vunpack.c.l.b16 %v82
    %v91 = vpack.c.b16 %v88, %v87
    %v92 = vpack.c.b16 %v90, %v89
    %vm95 = vcmask 261120
    %v97 = vsel %vm95, %v78, 0
    %99 = vmatprep.subr.bf16.mxu0 0
    %100 = vmatpush1.bf16.msra.mxu0 %v91
    %101 = vmatprep.subr.bf16.mxu0 0
    %102 = vmatpush1.bf16.msra.mxu0 %v92
    %103 = vmatprep.subr.bf16.mxu0 0
    %104 = vmatpush1.bf16.msra.mxu0 0
    %105 = vmatprep.subr.bf16.mxu0 0
    %106 = vmatpush1.bf16.msra.mxu0 0
    %107 = vmatprep.subr.bf16.mxu0 0
    %108 = vmatpush1.bf16.msra.mxu0 0
    %109 = vmatprep.subr.bf16.mxu0 0
    %110 = vmatpush1.bf16.msra.mxu0 0
    %111 = vmatprep.subr.bf16.mxu0 0
    %112 = vmatpush1.bf16.msra.mxu0 0
    %113 = vmatprep.subr.bf16.mxu0 0
    %114 = vmatpush1.bf16.msra.mxu0 0
    %115 = vmatprep.subr.bf16.mxu0 0
    %116 = vmatpush1.bf16.msra.mxu0 0
    %117 = vmatprep.subr.bf16.mxu0 0
    %118 = vmatpush1.bf16.msra.mxu0 0
    %119 = vmatprep.subr.bf16.mxu0 0
    %120 = vmatpush1.bf16.msra.mxu0 0
    %121 = vmatprep.subr.bf16.mxu0 0
    %122 = vmatpush1.bf16.msra.mxu0 0
    %123 = vmatprep.subr.bf16.mxu0 0
    %124 = vmatpush1.bf16.msra.mxu0 0
    %125 = vmatprep.subr.bf16.mxu0 0
    %126 = vmatpush1.bf16.msra.mxu0 0
    %127 = vmatprep.subr.bf16.mxu0 0
    %128 = vmatpush1.bf16.msra.mxu0 0
    %129 = vmatprep.subr.bf16.mxu0 0
    %130 = vmatpush1.bf16.msra.mxu0 0
    %131 = vmatprep.mubr.bf16.mxu0 0
    %132 = vmatmul.mubr.bf16.gmra.mrb[0].mxu0 %v97
    %v133 = vpop.f32.mrb[0].mxu0
    %v134 = vadd.f32 0.0, %v133
    %v135 = vpop.f32.mrb[0].mxu0
    %v136 = vpop.f32.mrb[0].mxu0
    %v137 = vpop.f32.mrb[0].mxu0
    %138 = vdwg.mxu0
    %v143 = vunpack.c.l.b16 %v74
    %v144 = vunpack.c.l.b16 %v75
    %v145 = vunpack.c.l.b16 %v76
    %v146 = vunpack.c.l.b16 %v77
    %v147 = vpack.c.b16 %v144, %v143
    %v148 = vpack.c.b16 %v146, %v145
    %v152 = vsel %vm95, %v73, 0
    %154 = vmatprep.subr.bf16.mxu0 0
    %155 = vmatpush1.bf16.msra.mxu0 %v147
    %156 = vmatprep.subr.bf16.mxu0 0
    %157 = vmatpush1.bf16.msra.mxu0 %v148
    %158 = vmatprep.subr.bf16.mxu0 0
    %159 = vmatpush1.bf16.msra.mxu0 0
    %160 = vmatprep.subr.bf16.mxu0 0
    %161 = vmatpush1.bf16.msra.mxu0 0
    %162 = vmatprep.subr.bf16.mxu0 0
    %163 = vmatpush1.bf16.msra.mxu0 0
    %164 = vmatprep.subr.bf16.mxu0 0
    %165 = vmatpush1.bf16.msra.mxu0 0
    %166 = vmatprep.subr.bf16.mxu0 0
    %167 = vmatpush1.bf16.msra.mxu0 0
    %168 = vmatprep.subr.bf16.mxu0 0
    %169 = vmatpush1.bf16.msra.mxu0 0
    %170 = vmatprep.subr.bf16.mxu0 0
    %171 = vmatpush1.bf16.msra.mxu0 0
    %172 = vmatprep.subr.bf16.mxu0 0
    %173 = vmatpush1.bf16.msra.mxu0 0
    %174 = vmatprep.subr.bf16.mxu0 0
    %175 = vmatpush1.bf16.msra.mxu0 0
    %176 = vmatprep.subr.bf16.mxu0 0
    %177 = vmatpush1.bf16.msra.mxu0 0
    %178 = vmatprep.subr.bf16.mxu0 0
    %179 = vmatpush1.bf16.msra.mxu0 0
    %180 = vmatprep.subr.bf16.mxu0 0
    %181 = vmatpush1.bf16.msra.mxu0 0
    %182 = vmatprep.subr.bf16.mxu0 0
    %183 = vmatpush1.bf16.msra.mxu0 0
    %184 = vmatprep.subr.bf16.mxu0 0
    %185 = vmatpush1.bf16.msra.mxu0 0
    %186 = vmatprep.mubr.bf16.mxu0 0
    %187 = vmatmul.mubr.bf16.gmra.mrb[0].mxu0 %v152
    %v188 = vpop.f32.mrb[0].mxu0
    %v189 = vadd.f32 %v134, %v188
    %v190 = vpop.f32.mrb[0].mxu0
    %v191 = vpop.f32.mrb[0].mxu0
    %v192 = vpop.f32.mrb[0].mxu0
    %193 = vdwg.mxu0
    %v194 = vld [vmem:[%s4] sm:$0x1]
    %v196 = vlaneseq
    %v197 = vshrl.u32 %v196, 7
    %v198 = vsub.s32 0, %v197
    %v199 = vrot.slane %v194, %v198
    %v201 = vadd.f32 %v189, %v199
    %v202 = vpack.c.bf16 %v201, %v201
    %vm203 = vcmask 257024
    %204 = vst.msk [vmem:[#allocation10] sm:$0xf] %vm203, %v202
    // Predicated region
    $region38: #{tpu_custom_call.1} parent=1 // pred_check
      _
    $region39: #{tpu_custom_call.1} parent=1 // pred_check_branch
      %206 = sbr.rel (0) target = $region41
    $region40: #{tpu_custom_call.1} parent=1 // pred_region
      %s208 = ssub.s32 64, 64
      %209 = vsyncadd [#allocation4], %s208
      %s211 = sshll.u32 [#allocation10], 4
      %s212 = int_to_ptr.vmem [resolvable:$true] %s211
      %214 = dma.vmem_to_hbm [thread:$0]  %s212, 64, %s5, [#allocation4]
    $region41: #{tpu_custom_call.1} parent=1 // pred_fallthru
      _
    // Predicated region
    $region42: #{tpu_custom_call.1} parent=1 // pred_check
      _
    $region43: #{tpu_custom_call.1} parent=1 // pred_check_branch
      %216 = sbr.rel (0) target = $region45
    $region44: #{tpu_custom_call.1} parent=1 // pred_region
      %217 = dma.done [#allocation4], 64
    $region45: #{tpu_custom_call.1} parent=1 // pred_fallthru
      _
    %218 = vsyncpa [#allocation3], 1
    %219 = vsyncpa [#allocation6], 1
    %220 = vsyncpa [#allocation9], 1
    %221 = vsyncpa [#allocation4], 1

</llo_original>
